<compile_context>
chip_gen: v7x
topology: tpu7x:2x2x1
jax: 0.10.0
libtpu: 0.0.40
codegen_flags: <defaults>
</compile_context>

<pallas_src>
import jax
import jax.numpy as jnp
from jax.experimental import pallas as pl
from jax.experimental.pallas import tpu as pltpu


def mlp_kernel(x_ref,
               w1_ref, b1_ref,
               w2_ref, b2_ref,
               w3_ref, b3_ref,
               w4_ref, b4_ref,
               o_ref):
    # x_ref: (in_f, tile_b)  -- batch on the lane axis
    xT = x_ref[...]

    # fc1 + relu : (16, 8) @ (8, tile_b) + (16, 1)
    h = jnp.maximum(
        jnp.dot(w1_ref[...], xT, preferred_element_type=jnp.float32) + b1_ref[...], 0.0)
    # fc2 + relu : (32, 16) @ (16, tile_b) + (32, 1)
    h = jnp.maximum(
        jnp.dot(w2_ref[...], h, preferred_element_type=jnp.float32) + b2_ref[...], 0.0)
    # fc3 + relu : (16, 32) @ (32, tile_b) + (16, 1)
    h = jnp.maximum(
        jnp.dot(w3_ref[...], h, preferred_element_type=jnp.float32) + b3_ref[...], 0.0)
    # fc4 : (2, 16) @ (16, tile_b) + (2, 1)  -> logits (2, tile_b)
    logits = jnp.dot(w4_ref[...], h, preferred_element_type=jnp.float32) + b4_ref[...]

    # log_softmax over the 2 classes (sublane rows): explicit 2-way reduction,
    # no cross-lane XLU reduce, only 2*tile_b exp() fed to the EUP.
    l0 = logits[0:1, :]
    l1 = logits[1:2, :]
    m = jnp.maximum(l0, l1)
    lse = m + jnp.log(jnp.exp(l0 - m) + jnp.exp(l1 - m))
    o_ref[...] = (logits - lse).astype(o_ref.dtype)


def mlp_forward(x, params, *, tile_b=8192, lane=256):
    """x: (B, 8) f32. params: list of (w, b) with w (in_f, out_f), b (1, out_f)."""
    (w1, b1), (w2, b2), (w3, b3), (w4, b4) = params
    B, in_f = x.shape
    out_dim = w4.shape[1]  # 2

    # --- transpose to feature-on-sublane / batch-on-lane layout (once, tiny) ---
    w1t, w2t, w3t, w4t = w1.T, w2.T, w3.T, w4.T              # (out_f, in_f)
    b1t, b2t, b3t, b4t = (b.reshape(-1, 1) for b in (b1, b2, b3, b4))  # (out_f, 1)
    xT = x.T                                                 # (in_f, B)

    # --- batch tiling along the lane axis: multiples of 256 (fills MXU on v6e/v7x) ---
    b_round = pl.cdiv(B, lane) * lane
    tile = max(lane, (min(tile_b, b_round) // lane) * lane)
    n_tiles = pl.cdiv(b_round, tile)
    # guarantee >=2 grid steps (v7x megacore) whenever there's enough work
    if n_tiles < 2 and b_round >= 2 * lane:
        tile = max(lane, ((b_round // 2) // lane) * lane)
        n_tiles = pl.cdiv(b_round, tile)
    B_pad = n_tiles * tile
    if B_pad != B:
        xT = jnp.pad(xT, ((0, 0), (0, B_pad - B)))

    # Weights/biases: full-array blocks with constant index_map -> VMEM-resident.
    def full(a):
        return pl.BlockSpec(a.shape, lambda i, _n=a.ndim: (0,) * _n)

    x_spec = pl.BlockSpec((in_f, tile), lambda i: (0, i))
    out_spec = pl.BlockSpec((out_dim, tile), lambda i: (0, i))

    # Advisory cost estimate for the XLA scheduler.
    flops = 2 * B_pad * (w1t.shape[0] * w1t.shape[1]
                         + w2t.shape[0] * w2t.shape[1]
                         + w3t.shape[0] * w3t.shape[1]
                         + w4t.shape[0] * w4t.shape[1])
    bytes_accessed = 4 * (xT.size + out_dim * B_pad
                          + sum(a.size for a in (w1t, b1t, w2t, b2t,
                                                 w3t, b3t, w4t, b4t)))
    cost = pl.CostEstimate(flops=flops,
                           transcendentals=3 * B_pad,   # 2 exp + 1 log per column
                           bytes_accessed=bytes_accessed)

    out = pl.pallas_call(
        mlp_kernel,
        out_shape=jax.ShapeDtypeStruct((out_dim, B_pad), jnp.float32),
        grid=(n_tiles,),
        in_specs=[x_spec,
                  full(w1t), full(b1t),
                  full(w2t), full(b2t),
                  full(w3t), full(b3t),
                  full(w4t), full(b4t)],
        out_specs=out_spec,
        compiler_params=pltpu.CompilerParams(
            dimension_semantics=("parallel",)),
        cost_estimate=cost,
    )(xT, w1t, b1t, w2t, b2t, w3t, b3t, w4t, b4t)

    # Drop batch padding and transpose back to the PyTorch (B, 2) convention
    # (2*B elements only; negligible).
    return out[:, :B].T


def init_linear(key, in_f, out_f):
    # Deterministic init mirroring PyTorch Linear defaults (uniform +/- 1/sqrt(in_f)),
    # weight stored as (in_f, out_f), bias as (1, out_f).
    kw, kb = jax.random.split(key)
    bound = 1.0 / jnp.sqrt(float(in_f))
    w = jax.random.uniform(kw, (in_f, out_f), jnp.float32, -bound, bound)
    b = jax.random.uniform(kb, (1, out_f), jnp.float32, -bound, bound)
    return w, b


def ref_forward(x, params):
    h = x
    for i, (w, b) in enumerate(params):
        h = h @ w + b
        if i < 3:
            h = jnp.maximum(h, 0.0)
    return jax.nn.log_softmax(h, axis=1)


if __name__ == "__main__":
    key = jax.random.PRNGKey(0)
    k_x, k_x2, k1, k2, k3, k4 = jax.random.split(key, 6)

    params = (
        init_linear(k1, 8, 16),
        init_linear(k2, 16, 32),
        init_linear(k3, 32, 16),
        init_linear(k4, 16, 2),
    )

    # Small batch (single grid step)
    B = 8
    x = jax.random.normal(k_x, (B, 8), jnp.float32)
    out = mlp_forward(x, params)
    jax.block_until_ready(out)
    assert out.shape == (B, 2), f"bad output shape {out.shape}"
    assert jnp.allclose(out, ref_forward(x, params), atol=1e-5), "mismatch vs reference"

    # Slightly larger batch exercising the multi-tile (>=2 grid steps) path
    B2 = 300
    x2 = jax.random.normal(k_x2, (B2, 8), jnp.float32)
    out2 = mlp_forward(x2, params)
    jax.block_until_ready(out2)
    assert out2.shape == (B2, 2), f"bad output shape {out2.shape}"
    assert jnp.allclose(out2, ref_forward(x2, params), atol=1e-5), "mismatch vs reference"

    print("KERNEL_OK")
</pallas_src>

<mosaic_0001>
module attributes {stable_mosaic.version = 11 : i64} {
  func.func @mlp_kernel(%arg0: i32, %arg1: memref<8x256xf32, #tpu.memory_space<vmem>>, %arg2: memref<16x8xf32, #tpu.memory_space<vmem>>, %arg3: memref<16x1xf32, #tpu.memory_space<vmem>>, %arg4: memref<32x16xf32, #tpu.memory_space<vmem>>, %arg5: memref<32x1xf32, #tpu.memory_space<vmem>>, %arg6: memref<16x32xf32, #tpu.memory_space<vmem>>, %arg7: memref<16x1xf32, #tpu.memory_space<vmem>>, %arg8: memref<2x16xf32, #tpu.memory_space<vmem>>, %arg9: memref<2x1xf32, #tpu.memory_space<vmem>>, %arg10: memref<2x256xf32, #tpu.memory_space<vmem>>) attributes {dimension_semantics = [#tpu.dimension_semantics<parallel>], iteration_bounds = array<i64: 1>, scalar_prefetch = 0 : i64, scratch_operands = 0 : i64, tpu.core_type = #tpu.core_type<tc>, window_params = [{transform_indices = @transform_0, window_bounds = array<i64: 8, 256>}, {pipeline_mode = #tpu.pipeline_mode<synchronous>, transform_indices = @transform_1, window_bounds = array<i64: 16, 8>}, {pipeline_mode = #tpu.pipeline_mode<synchronous>, transform_indices = @transform_2, window_bounds = array<i64: 16, 1>}, {pipeline_mode = #tpu.pipeline_mode<synchronous>, transform_indices = @transform_3, window_bounds = array<i64: 32, 16>}, {pipeline_mode = #tpu.pipeline_mode<synchronous>, transform_indices = @transform_4, window_bounds = array<i64: 32, 1>}, {pipeline_mode = #tpu.pipeline_mode<synchronous>, transform_indices = @transform_5, window_bounds = array<i64: 16, 32>}, {pipeline_mode = #tpu.pipeline_mode<synchronous>, transform_indices = @transform_6, window_bounds = array<i64: 16, 1>}, {pipeline_mode = #tpu.pipeline_mode<synchronous>, transform_indices = @transform_7, window_bounds = array<i64: 2, 16>}, {pipeline_mode = #tpu.pipeline_mode<synchronous>, transform_indices = @transform_8, window_bounds = array<i64: 2, 1>}, {transform_indices = @transform_9, window_bounds = array<i64: 2, 256>}]} {
    %c0 = arith.constant 0 : index
    %c0_0 = arith.constant 0 : index
    %0 = vector.load %arg1[%c0, %c0_0] : memref<8x256xf32, #tpu.memory_space<vmem>>, vector<8x256xf32>
    %c0_1 = arith.constant 0 : index
    %c0_2 = arith.constant 0 : index
    %1 = vector.load %arg2[%c0_1, %c0_2] : memref<16x8xf32, #tpu.memory_space<vmem>>, vector<16x8xf32>
    %cst = arith.constant dense<0.000000e+00> : vector<16x256xf32>
    %2 = tpu.matmul %1, %0, %cst {dimension_numbers = #tpu.dot_dimension_numbers<[1], [0], [0], [1], [0, 0, 1, 1], [], []>} : vector<16x8xf32>, vector<8x256xf32>, vector<16x256xf32> -> vector<16x256xf32>
    %c0_3 = arith.constant 0 : index
    %c0_4 = arith.constant 0 : index
    %3 = vector.load %arg3[%c0_3, %c0_4] : memref<16x1xf32, #tpu.memory_space<vmem>>, vector<16x1xf32>
    %4 = vector.broadcast %3 : vector<16x1xf32> to vector<16x256xf32>
    %5 = arith.addf %2, %4 : vector<16x256xf32>
    %cst_5 = arith.constant 0.000000e+00 : f32
    %6 = vector.broadcast %cst_5 : f32 to vector<16x256xf32>
    %7 = arith.maximumf %5, %6 : vector<16x256xf32>
    %c0_6 = arith.constant 0 : index
    %c0_7 = arith.constant 0 : index
    %8 = vector.load %arg4[%c0_6, %c0_7] : memref<32x16xf32, #tpu.memory_space<vmem>>, vector<32x16xf32>
    %cst_8 = arith.constant dense<0.000000e+00> : vector<32x256xf32>
    %9 = tpu.matmul %8, %7, %cst_8 {dimension_numbers = #tpu.dot_dimension_numbers<[1], [0], [0], [1], [0, 0, 1, 1], [], []>} : vector<32x16xf32>, vector<16x256xf32>, vector<32x256xf32> -> vector<32x256xf32>
    %c0_9 = arith.constant 0 : index
    %c0_10 = arith.constant 0 : index
    %10 = vector.load %arg5[%c0_9, %c0_10] : memref<32x1xf32, #tpu.memory_space<vmem>>, vector<32x1xf32>
    %11 = vector.broadcast %10 : vector<32x1xf32> to vector<32x256xf32>
    %12 = arith.addf %9, %11 : vector<32x256xf32>
    %cst_11 = arith.constant 0.000000e+00 : f32
    %13 = vector.broadcast %cst_11 : f32 to vector<32x256xf32>
    %14 = arith.maximumf %12, %13 : vector<32x256xf32>
    %c0_12 = arith.constant 0 : index
    %c0_13 = arith.constant 0 : index
    %15 = vector.load %arg6[%c0_12, %c0_13] : memref<16x32xf32, #tpu.memory_space<vmem>>, vector<16x32xf32>
    %cst_14 = arith.constant dense<0.000000e+00> : vector<16x256xf32>
    %16 = tpu.matmul %15, %14, %cst_14 {dimension_numbers = #tpu.dot_dimension_numbers<[1], [0], [0], [1], [0, 0, 1, 1], [], []>} : vector<16x32xf32>, vector<32x256xf32>, vector<16x256xf32> -> vector<16x256xf32>
    %c0_15 = arith.constant 0 : index
    %c0_16 = arith.constant 0 : index
    %17 = vector.load %arg7[%c0_15, %c0_16] : memref<16x1xf32, #tpu.memory_space<vmem>>, vector<16x1xf32>
    %18 = vector.broadcast %17 : vector<16x1xf32> to vector<16x256xf32>
    %19 = arith.addf %16, %18 : vector<16x256xf32>
    %cst_17 = arith.constant 0.000000e+00 : f32
    %20 = vector.broadcast %cst_17 : f32 to vector<16x256xf32>
    %21 = arith.maximumf %19, %20 : vector<16x256xf32>
    %c0_18 = arith.constant 0 : index
    %c0_19 = arith.constant 0 : index
    %22 = vector.load %arg8[%c0_18, %c0_19] : memref<2x16xf32, #tpu.memory_space<vmem>>, vector<2x16xf32>
    %cst_20 = arith.constant dense<0.000000e+00> : vector<2x256xf32>
    %23 = tpu.matmul %22, %21, %cst_20 {dimension_numbers = #tpu.dot_dimension_numbers<[1], [0], [0], [1], [0, 0, 1, 1], [], []>} : vector<2x16xf32>, vector<16x256xf32>, vector<2x256xf32> -> vector<2x256xf32>
    %c0_21 = arith.constant 0 : index
    %c0_22 = arith.constant 0 : index
    %24 = vector.load %arg9[%c0_21, %c0_22] : memref<2x1xf32, #tpu.memory_space<vmem>>, vector<2x1xf32>
    %25 = vector.broadcast %24 : vector<2x1xf32> to vector<2x256xf32>
    %26 = arith.addf %23, %25 : vector<2x256xf32>
    %27 = vector.extract_strided_slice %26 {offsets = [0, 0], sizes = [1, 256], strides = [1, 1]} : vector<2x256xf32> to vector<1x256xf32>
    %28 = vector.extract_strided_slice %26 {offsets = [1, 0], sizes = [1, 256], strides = [1, 1]} : vector<2x256xf32> to vector<1x256xf32>
    %29 = arith.maximumf %27, %28 : vector<1x256xf32>
    %30 = arith.subf %27, %29 : vector<1x256xf32>
    %31 = math.exp %30 : vector<1x256xf32>
    %32 = arith.subf %28, %29 : vector<1x256xf32>
    %33 = math.exp %32 : vector<1x256xf32>
    %34 = arith.addf %31, %33 : vector<1x256xf32>
    %35 = math.log %34 : vector<1x256xf32>
    %36 = arith.addf %29, %35 : vector<1x256xf32>
    %37 = vector.broadcast %36 : vector<1x256xf32> to vector<2x256xf32>
    %38 = arith.subf %26, %37 : vector<2x256xf32>
    %c0_23 = arith.constant 0 : index
    %c0_24 = arith.constant 0 : index
    %39 = vector.load %arg10[%c0_23, %c0_24] : memref<2x256xf32, #tpu.memory_space<vmem>>, vector<2x256xf32>
    tpu.vector_store %arg10[%c0_23, %c0_24], %38 {strides = array<i32>} : memref<2x256xf32, #tpu.memory_space<vmem>>, vector<2x256xf32>,
    return
  }
  func.func @transform_0(%arg0: i32) -> (i32, i32) {
    %c0_i32 = arith.constant 0 : i32
    %c0_i32_0 = arith.constant 0 : i32
    return %c0_i32, %arg0 : i32, i32
  }
  func.func @transform_1(%arg0: i32) -> (i32, i32) {
    %c0_i32 = arith.constant 0 : i32
    %c0_i32_0 = arith.constant 0 : i32
    %c0_i32_1 = arith.constant 0 : i32
    return %c0_i32, %c0_i32_0 : i32, i32
  }
  func.func @transform_2(%arg0: i32) -> (i32, i32) {
    %c0_i32 = arith.constant 0 : i32
    %c0_i32_0 = arith.constant 0 : i32
    %c0_i32_1 = arith.constant 0 : i32
    return %c0_i32, %c0_i32_0 : i32, i32
  }
  func.func @transform_3(%arg0: i32) -> (i32, i32) {
    %c0_i32 = arith.constant 0 : i32
    %c0_i32_0 = arith.constant 0 : i32
    %c0_i32_1 = arith.constant 0 : i32
    return %c0_i32, %c0_i32_0 : i32, i32
  }
  func.func @transform_4(%arg0: i32) -> (i32, i32) {
    %c0_i32 = arith.constant 0 : i32
    %c0_i32_0 = arith.constant 0 : i32
    %c0_i32_1 = arith.constant 0 : i32
    return %c0_i32, %c0_i32_0 : i32, i32
  }
  func.func @transform_5(%arg0: i32) -> (i32, i32) {
    %c0_i32 = arith.constant 0 : i32
    %c0_i32_0 = arith.constant 0 : i32
    %c0_i32_1 = arith.constant 0 : i32
    return %c0_i32, %c0_i32_0 : i32, i32
  }
  func.func @transform_6(%arg0: i32) -> (i32, i32) {
    %c0_i32 = arith.constant 0 : i32
    %c0_i32_0 = arith.constant 0 : i32
    %c0_i32_1 = arith.constant 0 : i32
    return %c0_i32, %c0_i32_0 : i32, i32
  }
  func.func @transform_7(%arg0: i32) -> (i32, i32) {
    %c0_i32 = arith.constant 0 : i32
    %c0_i32_0 = arith.constant 0 : i32
    %c0_i32_1 = arith.constant 0 : i32
    return %c0_i32, %c0_i32_0 : i32, i32
  }
  func.func @transform_8(%arg0: i32) -> (i32, i32) {
    %c0_i32 = arith.constant 0 : i32
    %c0_i32_0 = arith.constant 0 : i32
    %c0_i32_1 = arith.constant 0 : i32
    return %c0_i32, %c0_i32_0 : i32, i32
  }
  func.func @transform_9(%arg0: i32) -> (i32, i32) {
    %c0_i32 = arith.constant 0 : i32
    %c0_i32_0 = arith.constant 0 : i32
    return %c0_i32, %arg0 : i32, i32
  }
}

</mosaic_0001>

<llo_original>
// kernel: tpu_custom_call.1
$region0: #{tpu_custom_call.1}
  #allocation0 [shape = 'u32[]', space=smem, size = 0x4, offset = 0x4, fixed_abs, tag = 'smem constant byte address 0x4 - core index']
  #allocation1 [shape = 'u32[144,128]{1,0:T(1,128)}', space=vmem, size = 0x12000, scoped, tag = 'internal scratch']
  %s0 = inlined_call_operand.vmem [shape: f32[8,256], index: 0, kind: input, shape index: {}]
  %s1 = inlined_call_operand.vmem [shape: f32[16,8], index: 1, kind: input, shape index: {}]
  %s2 = inlined_call_operand.vmem [shape: f32[16,1], index: 2, kind: input, shape index: {}]
  %s3 = inlined_call_operand.vmem [shape: f32[32,16], index: 3, kind: input, shape index: {}]
  %s4 = inlined_call_operand.vmem [shape: f32[32,1], index: 4, kind: input, shape index: {}]
  %s5 = inlined_call_operand.vmem [shape: f32[16,32], index: 5, kind: input, shape index: {}]
  %s6 = inlined_call_operand.vmem [shape: f32[16,1], index: 6, kind: input, shape index: {}]
  %s7 = inlined_call_operand.vmem [shape: f32[2,16], index: 7, kind: input, shape index: {}]
  %s8 = inlined_call_operand.vmem [shape: f32[2,1], index: 8, kind: input, shape index: {}]
  %s9 = inlined_call_operand.hbm [shape: f32[2,256], index: 9, kind: output, shape index: {}]
  %s10 = sld [smem:[#allocation0]]
  $region46: #{tpu_custom_call.1} parent=0
    _
  %s12 = ssub.s32 1, %s10
  %s13 = scalar_select 0, %s12, %s10
  $region1: #{tpu_custom_call.1} parent=0
    #allocation2 [shape = 'u8[2048]{0}', space=vmem, size = 0x800, scoped, tag = 'output window, operand 0, single buffered']
    #allocation3 [shape = 's32[1]{0}', space=sflag, size = 0x4, scoped, tag = 'scoped memory for tpu_custom_call.1']
    %14 = vsyncpa [#allocation3], 0
    // Predicated region
    $region2: #{tpu_custom_call.1} parent=1 // pred_check
      _
    $region3: #{tpu_custom_call.1} parent=1 // pred_check_branch
      %16 = sbr.rel (0) target = $region5
    $region4: #{tpu_custom_call.1} parent=1 // pred_region
      _
    $region5: #{tpu_custom_call.1} parent=1 // pred_fallthru
      _
    // Predicated region
    $region6: #{tpu_custom_call.1} parent=1 // pred_check
      _
    $region7: #{tpu_custom_call.1} parent=1 // pred_check_branch
      %18 = sbr.rel (0) target = $region9
    $region8: #{tpu_custom_call.1} parent=1 // pred_region
      _
    $region9: #{tpu_custom_call.1} parent=1 // pred_fallthru
      _
    // Predicated region
    $region10: #{tpu_custom_call.1} parent=1 // pred_check
      _
    $region11: #{tpu_custom_call.1} parent=1 // pred_check_branch
      %20 = sbr.rel (0) target = $region13
    $region12: #{tpu_custom_call.1} parent=1 // pred_region
      _
    $region13: #{tpu_custom_call.1} parent=1 // pred_fallthru
      _
    // Predicated region
    $region14: #{tpu_custom_call.1} parent=1 // pred_check
      _
    $region15: #{tpu_custom_call.1} parent=1 // pred_check_branch
      %22 = sbr.rel (0) target = $region17
    $region16: #{tpu_custom_call.1} parent=1 // pred_region
      _
    $region17: #{tpu_custom_call.1} parent=1 // pred_fallthru
      _
    // Predicated region
    $region18: #{tpu_custom_call.1} parent=1 // pred_check
      _
    $region19: #{tpu_custom_call.1} parent=1 // pred_check_branch
      %24 = sbr.rel (0) target = $region21
    $region20: #{tpu_custom_call.1} parent=1 // pred_region
      _
    $region21: #{tpu_custom_call.1} parent=1 // pred_fallthru
      _
    // Predicated region
    $region22: #{tpu_custom_call.1} parent=1 // pred_check
      _
    $region23: #{tpu_custom_call.1} parent=1 // pred_check_branch
      %26 = sbr.rel (0) target = $region25
    $region24: #{tpu_custom_call.1} parent=1 // pred_region
      _
    $region25: #{tpu_custom_call.1} parent=1 // pred_fallthru
      _
    // Predicated region
    $region26: #{tpu_custom_call.1} parent=1 // pred_check
      _
    $region27: #{tpu_custom_call.1} parent=1 // pred_check_branch
      %28 = sbr.rel (0) target = $region29
    $region28: #{tpu_custom_call.1} parent=1 // pred_region
      _
    $region29: #{tpu_custom_call.1} parent=1 // pred_fallthru
      _
    // Predicated region
    $region30: #{tpu_custom_call.1} parent=1 // pred_check
      _
    $region31: #{tpu_custom_call.1} parent=1 // pred_check_branch
      %30 = sbr.rel (0) target = $region33
    $region32: #{tpu_custom_call.1} parent=1 // pred_region
      _
    $region33: #{tpu_custom_call.1} parent=1 // pred_fallthru
      _
    // Predicated region
    $region34: #{tpu_custom_call.1} parent=1 // pred_check
      _
    $region35: #{tpu_custom_call.1} parent=1 // pred_check_branch
      %32 = sbr.rel (0) target = $region37
    $region36: #{tpu_custom_call.1} parent=1 // pred_region
      _
    $region37: #{tpu_custom_call.1} parent=1 // pred_fallthru
      _
    %v33 = vld [vmem:[%s0] sm:$0xff]
    %v34 = vld [vmem:[%s0 + $0x8] sm:$0xff]
    %v35 = vld [vmem:[%s1] sm:$0xff]
    %v36 = vld [vmem:[%s1 + $0x8] sm:$0xff]
    %v37 = vld [vmem:[%s2] sm:$0xff]
    %v38 = vld [vmem:[%s2 + $0x8] sm:$0xff]
    %40 = vset.pattern.permute.xlu0 0
    %41 = vperm.xlu0 %40, %v37
    %v42 = vpop.permute.xlu0 %41
    %45 = vset.pattern.permute.xlu0 0
    %46 = vperm.xlu0 %45, %v38
    %v47 = vpop.permute.xlu0 %46
    %vm49 = vcmask 64512
    %v51 = vsel %vm49, %v35, 0
    %v54 = vsel %vm49, %v36, 0
    %56 = vmatprep.subr.mxu0 %v34
    %57 = vmatpush1.msra.mxu0 %v33
    %58 = vmatprep.subr.mxu0 0.0
    %59 = vmatpush1.msra.mxu0 0.0
    %60 = vmatprep.subr.mxu0 0.0
    %61 = vmatpush1.msra.mxu0 0.0
    %62 = vmatprep.subr.mxu0 0.0
    %63 = vmatpush1.msra.mxu0 0.0
    %64 = vmatprep.subr.mxu0 0.0
    %65 = vmatpush1.msra.mxu0 0.0
    %66 = vmatprep.subr.mxu0 0.0
    %67 = vmatpush1.msra.mxu0 0.0
    %68 = vmatprep.subr.mxu0 0.0
    %69 = vmatpush1.msra.mxu0 0.0
    %70 = vmatprep.subr.mxu0 0.0
    %71 = vmatpush1.msra.mxu0 0.0
    %72 = vmatprep.subr.mxu0 0.0
    %73 = vmatpush1.msra.mxu0 0.0
    %74 = vmatprep.subr.mxu0 0.0
    %75 = vmatpush1.msra.mxu0 0.0
    %76 = vmatprep.subr.mxu0 0.0
    %77 = vmatpush1.msra.mxu0 0.0
    %78 = vmatprep.subr.mxu0 0.0
    %79 = vmatpush1.msra.mxu0 0.0
    %80 = vmatprep.subr.mxu0 0.0
    %81 = vmatpush1.msra.mxu0 0.0
    %82 = vmatprep.subr.mxu0 0.0
    %83 = vmatpush1.msra.mxu0 0.0
    %84 = vmatprep.subr.mxu0 0.0
    %85 = vmatpush1.msra.mxu0 0.0
    %86 = vmatprep.subr.mxu0 0.0
    %87 = vmatpush1.msra.mxu0 0.0
    %88 = vmatprep.subr.mxu0 0.0
    %89 = vmatpush1.msra.mxu0 0.0
    %90 = vmatprep.subr.mxu0 0.0
    %91 = vmatpush1.msra.mxu0 0.0
    %92 = vmatprep.subr.mxu0 0.0
    %93 = vmatpush1.msra.mxu0 0.0
    %94 = vmatprep.subr.mxu0 0.0
    %95 = vmatpush1.msra.mxu0 0.0
    %96 = vmatprep.subr.mxu0 0.0
    %97 = vmatpush1.msra.mxu0 0.0
    %98 = vmatprep.subr.mxu0 0.0
    %99 = vmatpush1.msra.mxu0 0.0
    %100 = vmatprep.subr.mxu0 0.0
    %101 = vmatpush1.msra.mxu0 0.0
    %102 = vmatprep.subr.mxu0 0.0
    %103 = vmatpush1.msra.mxu0 0.0
    %104 = vmatprep.subr.mxu0 0.0
    %105 = vmatpush1.msra.mxu0 0.0
    %106 = vmatprep.subr.mxu0 0.0
    %107 = vmatpush1.msra.mxu0 0.0
    %108 = vmatprep.subr.mxu0 0.0
    %109 = vmatpush1.msra.mxu0 0.0
    %110 = vmatprep.subr.mxu0 0.0
    %111 = vmatpush1.msra.mxu0 0.0
    %112 = vmatprep.subr.mxu0 0.0
    %113 = vmatpush1.msra.mxu0 0.0
    %114 = vmatprep.subr.mxu0 0.0
    %115 = vmatpush1.msra.mxu0 0.0
    %116 = vmatprep.subr.mxu0 0.0
    %117 = vmatpush1.msra.mxu0 0.0
    %118 = vmatprep.subr.mxu0 0.0
    %119 = vmatpush1.msra.mxu0 0.0
    %120 = vmatprep.mubr.f32.mxu0 0.0
    %121 = vmatmul.mubr.f32.gmra.mrb[0].mxu0 %v51
    %v122 = vpop.f32.mrb[0].mxu0
    %v123 = vadd.f32 %v42, %v122
    %v124 = vpop.f32.mrb[0].mxu0
    %v125 = vadd.f32 %v42, %v124
    %126 = vmatprep.mubr.f32.mxu0 0.0
    %127 = vmatmul.mubr.f32.gmra.mrb[0].mxu0 %v54
    %v128 = vpop.f32.mrb[0].mxu0
    %v129 = vadd.f32 %v47, %v128
    %v130 = vpop.f32.mrb[0].mxu0
    %v131 = vadd.f32 %v47, %v130
    %132 = vdwg.mxu0
    %v133 = vmax.f32 %v123, 0.0
    %v134 = vmax.f32 %v125, 0.0
    %v135 = vmax.f32 %v129, 0.0
    %v136 = vmax.f32 %v131, 0.0
    %v137 = vld [vmem:[%s3] sm:$0xff]
    %v138 = vld [vmem:[%s3 + $0x8] sm:$0xff]
    %v139 = vld [vmem:[%s3 + $0x10] sm:$0xff]
    %v140 = vld [vmem:[%s3 + $0x18] sm:$0xff]
    %v141 = vld [vmem:[%s4] sm:$0xff]
    %v142 = vld [vmem:[%s4 + $0x8] sm:$0xff]
    %v143 = vld [vmem:[%s4 + $0x10] sm:$0xff]
    %v144 = vld [vmem:[%s4 + $0x18] sm:$0xff]
    %146 = vset.pattern.permute.xlu0 0
    %147 = vperm.xlu0 %146, %v141
    %v148 = vpop.permute.xlu0 %147
    %151 = vset.pattern.permute.xlu0 0
    %152 = vperm.xlu0 %151, %v142
    %v153 = vpop.permute.xlu0 %152
    %156 = vset.pattern.permute.xlu0 0
    %157 = vperm.xlu0 %156, %v143
    %v158 = vpop.permute.xlu0 %157
    %161 = vset.pattern.permute.xlu0 0
    %162 = vperm.xlu0 %161, %v144
    %v163 = vpop.permute.xlu0 %162
    %vm165 = vcmask 130048
    %v167 = vsel %vm165, %v137, 0
    %v170 = vsel %vm165, %v138, 0
    %v173 = vsel %vm165, %v139, 0
    %v176 = vsel %vm165, %v140, 0
    %178 = vmatprep.subr.mxu0 %v134
    %179 = vmatpush1.msra.mxu0 %v133
    %180 = vmatprep.subr.mxu0 %v136
    %181 = vmatpush1.msra.mxu0 %v135
    %182 = vmatprep.subr.mxu0 0.0
    %183 = vmatpush1.msra.mxu0 0.0
    %184 = vmatprep.subr.mxu0 0.0
    %185 = vmatpush1.msra.mxu0 0.0
    %186 = vmatprep.subr.mxu0 0.0
    %187 = vmatpush1.msra.mxu0 0.0
    %188 = vmatprep.subr.mxu0 0.0
    %189 = vmatpush1.msra.mxu0 0.0
    %190 = vmatprep.subr.mxu0 0.0
    %191 = vmatpush1.msra.mxu0 0.0
    %192 = vmatprep.subr.mxu0 0.0
    %193 = vmatpush1.msra.mxu0 0.0
    %194 = vmatprep.subr.mxu0 0.0
    %195 = vmatpush1.msra.mxu0 0.0
    %196 = vmatprep.subr.mxu0 0.0
    %197 = vmatpush1.msra.mxu0 0.0
    %198 = vmatprep.subr.mxu0 0.0
    %199 = vmatpush1.msra.mxu0 0.0
    %200 = vmatprep.subr.mxu0 0.0
    %201 = vmatpush1.msra.mxu0 0.0
    %202 = vmatprep.subr.mxu0 0.0
    %203 = vmatpush1.msra.mxu0 0.0
    %204 = vmatprep.subr.mxu0 0.0
    %205 = vmatpush1.msra.mxu0 0.0
    %206 = vmatprep.subr.mxu0 0.0
    %207 = vmatpush1.msra.mxu0 0.0
    %208 = vmatprep.subr.mxu0 0.0
    %209 = vmatpush1.msra.mxu0 0.0
    %210 = vmatprep.subr.mxu0 0.0
    %211 = vmatpush1.msra.mxu0 0.0
    %212 = vmatprep.subr.mxu0 0.0
    %213 = vmatpush1.msra.mxu0 0.0
    %214 = vmatprep.subr.mxu0 0.0
    %215 = vmatpush1.msra.mxu0 0.0
    %216 = vmatprep.subr.mxu0 0.0
    %217 = vmatpush1.msra.mxu0 0.0
    %218 = vmatprep.subr.mxu0 0.0
    %219 = vmatpush1.msra.mxu0 0.0
    %220 = vmatprep.subr.mxu0 0.0
    %221 = vmatpush1.msra.mxu0 0.0
    %222 = vmatprep.subr.mxu0 0.0
    %223 = vmatpush1.msra.mxu0 0.0
    %224 = vmatprep.subr.mxu0 0.0
    %225 = vmatpush1.msra.mxu0 0.0
    %226 = vmatprep.subr.mxu0 0.0
    %227 = vmatpush1.msra.mxu0 0.0
    %228 = vmatprep.subr.mxu0 0.0
    %229 = vmatpush1.msra.mxu0 0.0
    %230 = vmatprep.subr.mxu0 0.0
    %231 = vmatpush1.msra.mxu0 0.0
    %232 = vmatprep.subr.mxu0 0.0
    %233 = vmatpush1.msra.mxu0 0.0
    %234 = vmatprep.subr.mxu0 0.0
    %235 = vmatpush1.msra.mxu0 0.0
    %236 = vmatprep.subr.mxu0 0.0
    %237 = vmatpush1.msra.mxu0 0.0
    %238 = vmatprep.subr.mxu0 0.0
    %239 = vmatpush1.msra.mxu0 0.0
    %240 = vmatprep.subr.mxu0 0.0
    %241 = vmatpush1.msra.mxu0 0.0
    %242 = vmatprep.mubr.f32.mxu0 0.0
    %243 = vmatmul.mubr.f32.gmra.mrb[0].mxu0 %v167
    %v244 = vpop.f32.mrb[0].mxu0
    %v245 = vadd.f32 %v148, %v244
    %v246 = vpop.f32.mrb[0].mxu0
    %v247 = vadd.f32 %v148, %v246
    %248 = vmatprep.mubr.f32.mxu0 0.0
    %249 = vmatmul.mubr.f32.gmra.mrb[0].mxu0 %v170
    %v250 = vpop.f32.mrb[0].mxu0
    %v251 = vadd.f32 %v153, %v250
    %v252 = vpop.f32.mrb[0].mxu0
    %v253 = vadd.f32 %v153, %v252
    %254 = vmatprep.mubr.f32.mxu0 0.0
    %255 = vmatmul.mubr.f32.gmra.mrb[0].mxu0 %v173
    %v256 = vpop.f32.mrb[0].mxu0
    %v257 = vadd.f32 %v158, %v256
    %v258 = vpop.f32.mrb[0].mxu0
    %v259 = vadd.f32 %v158, %v258
    %260 = vmatprep.mubr.f32.mxu0 0.0
    %261 = vmatmul.mubr.f32.gmra.mrb[0].mxu0 %v176
    %v262 = vpop.f32.mrb[0].mxu0
    %v263 = vadd.f32 %v163, %v262
    %v264 = vpop.f32.mrb[0].mxu0
    %v265 = vadd.f32 %v163, %v264
    %266 = vdwg.mxu0
    %v267 = vmax.f32 %v245, 0.0
    %v268 = vmax.f32 %v247, 0.0
    %v269 = vmax.f32 %v251, 0.0
    %v270 = vmax.f32 %v253, 0.0
    %v271 = vmax.f32 %v257, 0.0
    %v272 = vmax.f32 %v259, 0.0
    %v273 = vmax.f32 %v263, 0.0
    %v274 = vmax.f32 %v265, 0.0
    %v275 = vld [vmem:[%s5] sm:$0xff]
    %v276 = vld [vmem:[%s5 + $0x8] sm:$0xff]
    %v277 = vld [vmem:[%s6] sm:$0xff]
    %v278 = vld [vmem:[%s6 + $0x8] sm:$0xff]
    %280 = vset.pattern.permute.xlu0 0
    %281 = vperm.xlu0 %280, %v277
    %v282 = vpop.permute.xlu0 %281
    %285 = vset.pattern.permute.xlu0 0
    %286 = vperm.xlu0 %285, %v278
    %v287 = vpop.permute.xlu0 %286
    %vm289 = vcmask 261120
    %v291 = vsel %vm289, %v275, 0
    %v294 = vsel %vm289, %v276, 0
    %296 = vmatprep.subr.mxu0 %v268
    %297 = vmatpush1.msra.mxu0 %v267
    %298 = vmatprep.subr.mxu0 %v270
    %299 = vmatpush1.msra.mxu0 %v269
    %300 = vmatprep.subr.mxu0 %v272
    %301 = vmatpush1.msra.mxu0 %v271
    %302 = vmatprep.subr.mxu0 %v274
    %303 = vmatpush1.msra.mxu0 %v273
    %304 = vmatprep.subr.mxu0 0.0
    %305 = vmatpush1.msra.mxu0 0.0
    %306 = vmatprep.subr.mxu0 0.0
    %307 = vmatpush1.msra.mxu0 0.0
    %308 = vmatprep.subr.mxu0 0.0
    %309 = vmatpush1.msra.mxu0 0.0
    %310 = vmatprep.subr.mxu0 0.0
    %311 = vmatpush1.msra.mxu0 0.0
    %312 = vmatprep.subr.mxu0 0.0
    %313 = vmatpush1.msra.mxu0 0.0
    %314 = vmatprep.subr.mxu0 0.0
    %315 = vmatpush1.msra.mxu0 0.0
    %316 = vmatprep.subr.mxu0 0.0
    %317 = vmatpush1.msra.mxu0 0.0
    %318 = vmatprep.subr.mxu0 0.0
    %319 = vmatpush1.msra.mxu0 0.0
    %320 = vmatprep.subr.mxu0 0.0
    %321 = vmatpush1.msra.mxu0 0.0
    %322 = vmatprep.subr.mxu0 0.0
    %323 = vmatpush1.msra.mxu0 0.0
    %324 = vmatprep.subr.mxu0 0.0
    %325 = vmatpush1.msra.mxu0 0.0
    %326 = vmatprep.subr.mxu0 0.0
    %327 = vmatpush1.msra.mxu0 0.0
    %328 = vmatprep.subr.mxu0 0.0
    %329 = vmatpush1.msra.mxu0 0.0
    %330 = vmatprep.subr.mxu0 0.0
    %331 = vmatpush1.msra.mxu0 0.0
    %332 = vmatprep.subr.mxu0 0.0
    %333 = vmatpush1.msra.mxu0 0.0
    %334 = vmatprep.subr.mxu0 0.0
    %335 = vmatpush1.msra.mxu0 0.0
    %336 = vmatprep.subr.mxu0 0.0
    %337 = vmatpush1.msra.mxu0 0.0
    %338 = vmatprep.subr.mxu0 0.0
    %339 = vmatpush1.msra.mxu0 0.0
    %340 = vmatprep.subr.mxu0 0.0
    %341 = vmatpush1.msra.mxu0 0.0
    %342 = vmatprep.subr.mxu0 0.0
    %343 = vmatpush1.msra.mxu0 0.0
    %344 = vmatprep.subr.mxu0 0.0
    %345 = vmatpush1.msra.mxu0 0.0
    %346 = vmatprep.subr.mxu0 0.0
    %347 = vmatpush1.msra.mxu0 0.0
    %348 = vmatprep.subr.mxu0 0.0
    %349 = vmatpush1.msra.mxu0 0.0
    %350 = vmatprep.subr.mxu0 0.0
    %351 = vmatpush1.msra.mxu0 0.0
    %352 = vmatprep.subr.mxu0 0.0
    %353 = vmatpush1.msra.mxu0 0.0
    %354 = vmatprep.subr.mxu0 0.0
    %355 = vmatpush1.msra.mxu0 0.0
    %356 = vmatprep.subr.mxu0 0.0
    %357 = vmatpush1.msra.mxu0 0.0
    %358 = vmatprep.subr.mxu0 0.0
    %359 = vmatpush1.msra.mxu0 0.0
    %360 = vmatprep.mubr.f32.mxu0 0.0
    %361 = vmatmul.mubr.f32.gmra.mrb[0].mxu0 %v291
    %v362 = vpop.f32.mrb[0].mxu0
    %v363 = vadd.f32 %v282, %v362
    %v364 = vpop.f32.mrb[0].mxu0
    %v365 = vadd.f32 %v282, %v364
    %366 = vmatprep.mubr.f32.mxu0 0.0
    %367 = vmatmul.mubr.f32.gmra.mrb[0].mxu0 %v294
    %v368 = vpop.f32.mrb[0].mxu0
    %v369 = vadd.f32 %v287, %v368
    %v370 = vpop.f32.mrb[0].mxu0
    %v371 = vadd.f32 %v287, %v370
    %372 = vdwg.mxu0
    %v373 = vmax.f32 %v363, 0.0
    %v374 = vmax.f32 %v365, 0.0
    %v375 = vmax.f32 %v369, 0.0
    %v376 = vmax.f32 %v371, 0.0
    %v377 = vld [vmem:[%s7] sm:$0x3]
    %v378 = vld [vmem:[%s8] sm:$0x3]
    %380 = vset.pattern.permute.xlu0 0
    %381 = vperm.xlu0 %380, %v378
    %v382 = vpop.permute.xlu0 %381
    %v385 = vsel %vm165, %v377, 0
    %387 = vmatprep.subr.mxu0 %v374
    %388 = vmatpush1.msra.mxu0 %v373
    %389 = vmatprep.subr.mxu0 %v376
    %390 = vmatpush1.msra.mxu0 %v375
    %391 = vmatprep.subr.mxu0 0.0
    %392 = vmatpush1.msra.mxu0 0.0
    %393 = vmatprep.subr.mxu0 0.0
    %394 = vmatpush1.msra.mxu0 0.0
    %395 = vmatprep.subr.mxu0 0.0
    %396 = vmatpush1.msra.mxu0 0.0
    %397 = vmatprep.subr.mxu0 0.0
    %398 = vmatpush1.msra.mxu0 0.0
    %399 = vmatprep.subr.mxu0 0.0
    %400 = vmatpush1.msra.mxu0 0.0
    %401 = vmatprep.subr.mxu0 0.0
    %402 = vmatpush1.msra.mxu0 0.0
    %403 = vmatprep.subr.mxu0 0.0
    %404 = vmatpush1.msra.mxu0 0.0
    %405 = vmatprep.subr.mxu0 0.0
    %406 = vmatpush1.msra.mxu0 0.0
    %407 = vmatprep.subr.mxu0 0.0
    %408 = vmatpush1.msra.mxu0 0.0
    %409 = vmatprep.subr.mxu0 0.0
    %410 = vmatpush1.msra.mxu0 0.0
    %411 = vmatprep.subr.mxu0 0.0
    %412 = vmatpush1.msra.mxu0 0.0
    %413 = vmatprep.subr.mxu0 0.0
    %414 = vmatpush1.msra.mxu0 0.0
    %415 = vmatprep.subr.mxu0 0.0
    %416 = vmatpush1.msra.mxu0 0.0
    %417 = vmatprep.subr.mxu0 0.0
    %418 = vmatpush1.msra.mxu0 0.0
    %419 = vmatprep.subr.mxu0 0.0
    %420 = vmatpush1.msra.mxu0 0.0
    %421 = vmatprep.subr.mxu0 0.0
    %422 = vmatpush1.msra.mxu0 0.0
    %423 = vmatprep.subr.mxu0 0.0
    %424 = vmatpush1.msra.mxu0 0.0
    %425 = vmatprep.subr.mxu0 0.0
    %426 = vmatpush1.msra.mxu0 0.0
    %427 = vmatprep.subr.mxu0 0.0
    %428 = vmatpush1.msra.mxu0 0.0
    %429 = vmatprep.subr.mxu0 0.0
    %430 = vmatpush1.msra.mxu0 0.0
    %431 = vmatprep.subr.mxu0 0.0
    %432 = vmatpush1.msra.mxu0 0.0
    %433 = vmatprep.subr.mxu0 0.0
    %434 = vmatpush1.msra.mxu0 0.0
    %435 = vmatprep.subr.mxu0 0.0
    %436 = vmatpush1.msra.mxu0 0.0
    %437 = vmatprep.subr.mxu0 0.0
    %438 = vmatpush1.msra.mxu0 0.0
    %439 = vmatprep.subr.mxu0 0.0
    %440 = vmatpush1.msra.mxu0 0.0
    %441 = vmatprep.subr.mxu0 0.0
    %442 = vmatpush1.msra.mxu0 0.0
    %443 = vmatprep.subr.mxu0 0.0
    %444 = vmatpush1.msra.mxu0 0.0
    %445 = vmatprep.subr.mxu0 0.0
    %446 = vmatpush1.msra.mxu0 0.0
    %447 = vmatprep.subr.mxu0 0.0
    %448 = vmatpush1.msra.mxu0 0.0
    %449 = vmatprep.subr.mxu0 0.0
    %450 = vmatpush1.msra.mxu0 0.0
    %451 = vmatprep.mubr.f32.mxu0 0.0
    %452 = vmatmul.mubr.f32.gmra.mrb[0].mxu0 %v385
    %v453 = vpop.f32.mrb[0].mxu0
    %v454 = vadd.f32 %v382, %v453
    %v455 = vpop.f32.mrb[0].mxu0
    %v456 = vadd.f32 %v382, %v455
    %457 = vdwg.mxu0
    %v460 = vrot.slane %v454, 1
    %v461 = vrot.slane %v456, 1
    %v464 = vmax.f32 %v454, %v460
    %v465 = vmax.f32 %v456, %v461
    %v466 = vsub.f32 %v454, %v464
    %v467 = vsub.f32 %v456, %v465
    %v468 = vmul.f32 %v466, 1.442695
    %v469 = vpow.pop %v468
    %v470 = vmul.f32 %v467, 1.442695
    %v471 = vpow.pop %v470
    %v474 = vrot.slane %v464, 7
    %v475 = vrot.slane %v465, 7
    %v478 = vsub.f32 %v454, %v474
    %v479 = vsub.f32 %v456, %v475
    %v480 = vmul.f32 %v478, 1.442695
    %v481 = vpow.pop %v480
    %v482 = vmul.f32 %v479, 1.442695
    %v483 = vpow.pop %v482
    %v486 = vrot.slane %v481, 1
    %v487 = vrot.slane %v483, 1
    %v490 = vadd.f32 %v469, %v486
    %v491 = vadd.f32 %v471, %v487
    %v492 = vlog2.pop %v490
    %v493 = vmul.f32 %v492, 0.6931472
    %v494 = vlog2.pop %v491
    %v495 = vmul.f32 %v494, 0.6931472
    %v496 = vadd.f32 %v464, %v493
    %v497 = vadd.f32 %v465, %v495
    %v498 = vlaneseq
    %v499 = vshrl.u32 %v498, 7
    %v500 = vsub.s32 0, %v499
    %v501 = vrot.slane %v496, %v500
    %v502 = vlaneseq
    %v503 = vshrl.u32 %v502, 7
    %v504 = vsub.s32 0, %v503
    %v505 = vrot.slane %v497, %v504
    %v506 = vsub.f32 %v454, %v501
    %v507 = vsub.f32 %v456, %v505
    %v510 = vcombine.low %v506, %v507
    %v512 = vunpack.c.l.s4 1983009808
    %v513 = vunpack.c.0.s8 %v512
    %v514 = vlaneseq
    %v515 = vshrl.u32 %v514, 7
    %v516 = vsub.s32 %v513, %v515
    %v517 = vrot.slane %v510, %v516
    %519 = vst [vmem:[#allocation2] sm:$0xf] %v517
    // Predicated region
    $region38: #{tpu_custom_call.1} parent=1 // pred_check
      _
    $region39: #{tpu_custom_call.1} parent=1 // pred_check_branch
      %521 = sbr.rel (0) target = $region41
    $region40: #{tpu_custom_call.1} parent=1 // pred_region
      %s523 = ssub.s32 64, 64
      %524 = vsyncadd [#allocation3], %s523
      %s526 = sshll.u32 [#allocation2], 4
      %s527 = int_to_ptr.vmem [resolvable:$true] %s526
      %529 = dma.vmem_to_hbm [thread:$0]  %s527, 64, %s9, [#allocation3]
    $region41: #{tpu_custom_call.1} parent=1 // pred_fallthru
      _
    // Predicated region
    $region42: #{tpu_custom_call.1} parent=1 // pred_check
      _
    $region43: #{tpu_custom_call.1} parent=1 // pred_check_branch
      %531 = sbr.rel (0) target = $region45
    $region44: #{tpu_custom_call.1} parent=1 // pred_region
      %532 = dma.done [#allocation3], 64
    $region45: #{tpu_custom_call.1} parent=1 // pred_fallthru
      _
    %533 = vsyncpa [#allocation3], 1

</llo_original>
